<compile_context>
chip_gen: v7x
topology: tpu7x:2x2x1
jax: 0.10.0
libtpu: 0.0.40
codegen_flags: <defaults>
</compile_context>

<pallas_src>
import functools

import jax
import jax.numpy as jnp
from jax import lax
from jax.experimental import pallas as pl
from jax.experimental.pallas import tpu as pltpu


def _blur_kernel(x_ref, o_ref, *, H, W):
    """x_ref / o_ref: (Bp, H*W) VMEM blocks; each row is one flattened (H, W) plane."""
    HW = H * W
    x = x_ref[...].astype(jnp.float32)                        # (Bp, HW)

    # Flattened spatial index f = i*W + j along the lane-dense last axis.
    f = lax.broadcasted_iota(jnp.int32, x.shape, 1)
    if (W & (W - 1)) == 0:                                     # power-of-two fast path
        j = jnp.bitwise_and(f, W - 1)
    else:
        j = f % W
    left   = j == 0            # column 0   -> x[i, j-1] is zero padding
    right  = j == W - 1        # column W-1 -> x[i, j+1] is zero padding
    top    = f < W             # row 0      -> x[i-1, j] is zero padding
    bottom = f >= HW - W       # row H-1    -> x[i+1, j] is zero padding

    zero = jnp.zeros_like(x)
    # Vertical 3-tap sum with zero padding: v[i,j] = x[i-1,j] + x[i,j] + x[i+1,j].
    # jnp.roll uses static shifts; the wrapped lanes are masked to zero, so wrap direction
    # doesn't matter. (pltpu.roll requires non-negative shifts, hence jnp.roll here.)
    x_up   = jnp.where(top,    zero, jnp.roll(x, W,  axis=1))   # x_up[f]   = x[f - W]
    x_down = jnp.where(bottom, zero, jnp.roll(x, -W, axis=1))   # x_down[f] = x[f + W]
    v = x_up + x + x_down
    # Horizontal 3-tap sum of v with zero padding -> full zero-padded 3x3 neighborhood sum.
    v_left  = jnp.where(left,  zero, jnp.roll(v, 1,  axis=1))   # v_left[f]  = v[f - 1]
    v_right = jnp.where(right, zero, jnp.roll(v, -1, axis=1))   # v_right[f] = v[f + 1]
    box = v_left + v + v_right

    # weight = [[-1,-1,-1],[-1,8,-1],[-1,-1,-1]]/3  =>  out = (9*x - box)/3 = 3*x - box/3
    o_ref[...] = (3.0 * x - box * (1.0 / 3.0)).astype(o_ref.dtype)


def gaussian_blur(x):
    """x: (N, C, H, W). Per-channel 3x3 conv (padding=1) with the module's fixed kernel."""
    N, C, H, W = x.shape
    P, HW = N * C, H * W
    xf = x.reshape(P, HW)  # free metadata reshape (NCHW is contiguous) -> lane-dense slab

    # Plane-block sizing: whole stack when it fits a conservative per-buffer budget; otherwise
    # a multiple of 8 planes (sublane constraint) so the double-buffered in+out pipeline stays
    # well inside scoped VMEM on every generation.
    itemsize = xf.dtype.itemsize
    budget = 2 * 1024 * 1024
    if P * HW * itemsize <= budget:
        bp = P
    else:
        bp = max(8, (budget // (HW * itemsize)) // 8 * 8)
    grid = (pl.cdiv(P, bp),)
    # TODO(synk): for single planes larger than the budget, add H-row tiling with a 1-row halo.

    kernel = functools.partial(_blur_kernel, H=H, W=W)
    out = pl.pallas_call(
        kernel,
        out_shape=jax.ShapeDtypeStruct((P, HW), x.dtype),
        grid_spec=pltpu.PrefetchScalarGridSpec(
            num_scalar_prefetch=0,
            grid=grid,
            in_specs=[pl.BlockSpec((bp, HW), lambda p: (p, 0))],
            out_specs=pl.BlockSpec((bp, HW), lambda p: (p, 0)),
        ),
        compiler_params=pltpu.CompilerParams(
            dimension_semantics=("parallel",),
            vmem_limit_bytes=32 * 1024 * 1024,
        ),
        cost_estimate=pl.CostEstimate(
            flops=11 * P * HW,
            transcendentals=0,
            bytes_accessed=2 * P * HW * itemsize,
        ),
    )(xf)
    return out.reshape(N, C, H, W)


if __name__ == "__main__":
    key = jax.random.PRNGKey(0)
    x = jax.random.normal(key, (2, 3, 16, 16), dtype=jnp.float32)

    out = jax.block_until_ready(gaussian_blur(x))

    # Reference: per-channel conv2d with padding=1 and the module's fixed weight.
    w = jnp.array([[-1., -1., -1.],
                   [-1.,  8., -1.],
                   [-1., -1., -1.]], dtype=jnp.float32) / 3.0
    w4 = jnp.broadcast_to(w[None, None], (3, 1, 3, 3))
    ref = lax.conv_general_dilated(
        x, w4, window_strides=(1, 1), padding=((1, 1), (1, 1)),
        dimension_numbers=("NCHW", "OIHW", "NCHW"), feature_group_count=3)

    assert out.shape == x.shape
    assert jnp.allclose(out, ref, atol=1e-5, rtol=1e-5)
    print("KERNEL_OK")
</pallas_src>

<mosaic_0001>
module attributes {stable_mosaic.version = 11 : i64} {
  func.func @_blur_kernel(%arg0: i32, %arg1: memref<6x256xf32, #tpu.memory_space<vmem>>, %arg2: memref<6x256xf32, #tpu.memory_space<vmem>>) attributes {dimension_semantics = [#tpu.dimension_semantics<parallel>], iteration_bounds = array<i64: 1>, scalar_prefetch = 0 : i64, scratch_operands = 0 : i64, tpu.core_type = #tpu.core_type<tc>, window_params = [{transform_indices = @transform_0, window_bounds = array<i64: 6, 256>}, {transform_indices = @transform_1, window_bounds = array<i64: 6, 256>}]} {
    %c0 = arith.constant 0 : index
    %c0_0 = arith.constant 0 : index
    %0 = vector.load %arg1[%c0, %c0_0] : memref<6x256xf32, #tpu.memory_space<vmem>>, vector<6x256xf32>
    %1 = tpu.iota {dimensions = array<i32: 1>} : vector<6x256xi32>
    %c15_i32 = arith.constant 15 : i32
    %2 = vector.broadcast %c15_i32 : i32 to vector<6x256xi32>
    %3 = arith.andi %1, %2 : vector<6x256xi32>
    %c0_i32 = arith.constant 0 : i32
    %4 = vector.broadcast %c0_i32 : i32 to vector<6x256xi32>
    %5 = arith.cmpi eq, %3, %4 : vector<6x256xi32>
    %c15_i32_1 = arith.constant 15 : i32
    %6 = vector.broadcast %c15_i32_1 : i32 to vector<6x256xi32>
    %7 = arith.cmpi eq, %3, %6 : vector<6x256xi32>
    %c16_i32 = arith.constant 16 : i32
    %8 = vector.broadcast %c16_i32 : i32 to vector<6x256xi32>
    %9 = arith.cmpi slt, %1, %8 : vector<6x256xi32>
    %c240_i32 = arith.constant 240 : i32
    %10 = vector.broadcast %c240_i32 : i32 to vector<6x256xi32>
    %11 = arith.cmpi sge, %1, %10 : vector<6x256xi32>
    %cst = arith.constant 0.000000e+00 : f32
    %12 = vector.broadcast %cst : f32 to vector<6x256xf32>
    %13 = vector.extract_strided_slice %0 {offsets = [0, 240], sizes = [6, 16], strides = [1, 1]} : vector<6x256xf32> to vector<6x16xf32>
    %14 = vector.extract_strided_slice %0 {offsets = [0, 0], sizes = [6, 240], strides = [1, 1]} : vector<6x256xf32> to vector<6x240xf32>
    %15 = tpu.concatenate %13, %14 in 1 : vector<6x16xf32>, vector<6x240xf32> -> vector<6x256xf32>
    %16 = arith.select %9, %12, %15 : vector<6x256xi1>, vector<6x256xf32>
    %17 = vector.extract_strided_slice %0 {offsets = [0, 16], sizes = [6, 240], strides = [1, 1]} : vector<6x256xf32> to vector<6x240xf32>
    %18 = vector.extract_strided_slice %0 {offsets = [0, 0], sizes = [6, 16], strides = [1, 1]} : vector<6x256xf32> to vector<6x16xf32>
    %19 = tpu.concatenate %17, %18 in 1 : vector<6x240xf32>, vector<6x16xf32> -> vector<6x256xf32>
    %20 = arith.select %11, %12, %19 : vector<6x256xi1>, vector<6x256xf32>
    %21 = arith.addf %16, %0 : vector<6x256xf32>
    %22 = arith.addf %21, %20 : vector<6x256xf32>
    %23 = vector.extract_strided_slice %22 {offsets = [0, 255], sizes = [6, 1], strides = [1, 1]} : vector<6x256xf32> to vector<6x1xf32>
    %24 = vector.extract_strided_slice %22 {offsets = [0, 0], sizes = [6, 255], strides = [1, 1]} : vector<6x256xf32> to vector<6x255xf32>
    %25 = tpu.concatenate %23, %24 in 1 : vector<6x1xf32>, vector<6x255xf32> -> vector<6x256xf32>
    %26 = arith.select %5, %12, %25 : vector<6x256xi1>, vector<6x256xf32>
    %27 = vector.extract_strided_slice %22 {offsets = [0, 1], sizes = [6, 255], strides = [1, 1]} : vector<6x256xf32> to vector<6x255xf32>
    %28 = vector.extract_strided_slice %22 {offsets = [0, 0], sizes = [6, 1], strides = [1, 1]} : vector<6x256xf32> to vector<6x1xf32>
    %29 = tpu.concatenate %27, %28 in 1 : vector<6x255xf32>, vector<6x1xf32> -> vector<6x256xf32>
    %30 = arith.select %7, %12, %29 : vector<6x256xi1>, vector<6x256xf32>
    %31 = arith.addf %26, %22 : vector<6x256xf32>
    %32 = arith.addf %31, %30 : vector<6x256xf32>
    %cst_2 = arith.constant 3.000000e+00 : f32
    %33 = vector.broadcast %cst_2 : f32 to vector<6x256xf32>
    %34 = arith.mulf %33, %0 : vector<6x256xf32>
    %cst_3 = arith.constant 0.333333343 : f32
    %35 = vector.broadcast %cst_3 : f32 to vector<6x256xf32>
    %36 = arith.mulf %32, %35 : vector<6x256xf32>
    %37 = arith.subf %34, %36 : vector<6x256xf32>
    %c0_4 = arith.constant 0 : index
    %c0_5 = arith.constant 0 : index
    %38 = vector.load %arg2[%c0_4, %c0_5] : memref<6x256xf32, #tpu.memory_space<vmem>>, vector<6x256xf32>
    tpu.vector_store %arg2[%c0_4, %c0_5], %37 {strides = array<i32>} : memref<6x256xf32, #tpu.memory_space<vmem>>, vector<6x256xf32>,
    return
  }
  func.func @transform_0(%arg0: i32) -> (i32, i32) {
    %c0_i32 = arith.constant 0 : i32
    %c0_i32_0 = arith.constant 0 : i32
    return %arg0, %c0_i32 : i32, i32
  }
  func.func @transform_1(%arg0: i32) -> (i32, i32) {
    %c0_i32 = arith.constant 0 : i32
    %c0_i32_0 = arith.constant 0 : i32
    return %arg0, %c0_i32 : i32, i32
  }
}

</mosaic_0001>

<llo_original>
// kernel: tpu_custom_call.1
$region0: #{tpu_custom_call.1}
  #allocation0 [shape = 'u32[]', space=smem, size = 0x4, offset = 0x4, fixed_abs, tag = 'smem constant byte address 0x4 - core index']
  #allocation1 [shape = 'u32[144,128]{1,0:T(1,128)}', space=vmem, size = 0x12000, scoped, tag = 'internal scratch']
  %s0 = inlined_call_operand.hbm [shape: f32[6,256], index: 0, kind: input, shape index: {}]
  %s1 = inlined_call_operand.hbm [shape: f32[6,256], index: 1, kind: output, shape index: {}]
  %s2 = sld [smem:[#allocation0]]
  $region18: #{tpu_custom_call.1} parent=0
    _
  %s4 = ssub.s32 1, %s2
  %s5 = scalar_select 0, %s4, %s2
  $region1: #{tpu_custom_call.1} parent=0
    #allocation2 [shape = 'u8[8192]{0}', space=vmem, size = 0x2000, scoped, tag = 'input window, operand 0, single buffered']
    #allocation3 [shape = 's32[1]{0}', space=sflag, size = 0x4, scoped, tag = 'scoped memory for tpu_custom_call.1']
    #allocation4 [shape = 's32[1]{0}', space=sflag, size = 0x4, scoped, tag = 'scoped memory for tpu_custom_call.1']
    #allocation5 [shape = 'u8[8192]{0}', space=vmem, size = 0x2000, scoped, tag = 'output window, operand 0, single buffered']
    %6 = vsyncpa [#allocation3], 0
    %7 = vsyncpa [#allocation4], 0
    // Predicated region
    $region2: #{tpu_custom_call.1} parent=1 // pred_check
      _
    $region3: #{tpu_custom_call.1} parent=1 // pred_check_branch
      %9 = sbr.rel (0) target = $region5
    $region4: #{tpu_custom_call.1} parent=1 // pred_region
      %s11 = ssub.s32 256, 256
      %12 = vsyncadd [#allocation3], %s11
      %s14 = sshll.u32 [#allocation2], 4
      %s15 = int_to_ptr.vmem [resolvable:$true] %s14
      %17 = dma.hbm_to_vmem [thread:$0]  %s0, 256, %s15, [#allocation3]
    $region5: #{tpu_custom_call.1} parent=1 // pred_fallthru
      _
    // Predicated region
    $region6: #{tpu_custom_call.1} parent=1 // pred_check
      _
    $region7: #{tpu_custom_call.1} parent=1 // pred_check_branch
      %19 = sbr.rel (0) target = $region9
    $region8: #{tpu_custom_call.1} parent=1 // pred_region
      %20 = dma.done [#allocation3], 256
    $region9: #{tpu_custom_call.1} parent=1 // pred_fallthru
      _
    %v21 = vld [vmem:[#allocation2] sm:$0x3f]
    %v22 = vld [vmem:[#allocation2 + $0x8] sm:$0x3f]
    %v23 = vlaneseq
    %v24 = vand.u32 %v23, 127
    %v25 = vadd.s32 %v24, 128
    %v26 = vand.u32 %v24, 15
    %v27 = vand.u32 %v25, 15
    %vm28 = vcmp.eq.s32.totalorder %v26, 0
    %vm29 = vcmp.eq.s32.totalorder %v27, 0
    %vm30 = vcmp.eq.s32.totalorder %v26, 15
    %vm31 = vcmp.eq.s32.totalorder %v27, 15
    %vm32 = vcmp.lt.s32.totalorder %v24, 16
    %vm33 = vcmp.lt.s32.totalorder %v25, 16
    %vm34 = vcmp.ge.s32.totalorder %v24, 240
    %vm35 = vcmp.ge.s32.totalorder %v25, 240
    %37 = vrot.lane.b32.xlu0 %v22, 16
    %v38 = vpop.permute.xlu0 %37
    %41 = vrot.lane.b32.xlu0 %v21, 16
    %v42 = vpop.permute.xlu0 %41
    %vm43 = vcmask 130048
    %v44 = vsel %vm43, %v42, %v38
    %v47 = vsel %vm43, %v38, %v42
    %v48 = vsel %vm32, 0.0, %v47
    %v49 = vsel %vm33, 0.0, %v44
    %50 = vrot.lane.b32.xlu0 %v21, 112
    %v51 = vpop.permute.xlu0 %50
    %52 = vrot.lane.b32.xlu0 %v22, 112
    %v53 = vpop.permute.xlu0 %52
    %vm54 = vcmask 916480
    %v55 = vsel %vm54, %v51, %v53
    %v59 = vsel %vm54, %v53, %v51
    %v60 = vsel %vm34, 0.0, %v55
    %v61 = vsel %vm35, 0.0, %v59
    %v62 = vadd.f32 %v48, %v21
    %v63 = vadd.f32 %v49, %v22
    %v64 = vadd.f32 %v62, %v60
    %v65 = vadd.f32 %v63, %v61
    %67 = vrot.lane.b32.xlu0 %v65, 1
    %v68 = vpop.permute.xlu0 %67
    %71 = vrot.lane.b32.xlu0 %v64, 1
    %v72 = vpop.permute.xlu0 %71
    %vm73 = vcmask 7168
    %v74 = vsel %vm73, %v72, %v68
    %v77 = vsel %vm73, %v68, %v72
    %v78 = vsel %vm28, 0.0, %v77
    %v79 = vsel %vm29, 0.0, %v74
    %80 = vrot.lane.b32.xlu0 %v64, 127
    %v81 = vpop.permute.xlu0 %80
    %82 = vrot.lane.b32.xlu0 %v65, 127
    %v83 = vpop.permute.xlu0 %82
    %vm84 = vcmask 1039360
    %v85 = vsel %vm84, %v81, %v83
    %v89 = vsel %vm84, %v83, %v81
    %v90 = vsel %vm30, 0.0, %v85
    %v91 = vsel %vm31, 0.0, %v89
    %v92 = vadd.f32 %v78, %v64
    %v93 = vadd.f32 %v79, %v65
    %v94 = vadd.f32 %v92, %v90
    %v95 = vadd.f32 %v93, %v91
    %v96 = vmul.f32 %v21, 3.0
    %v97 = vmul.f32 %v22, 3.0
    %v98 = vmul.f32 %v94, 0.33333334
    %v99 = vmul.f32 %v95, 0.33333334
    %v100 = vsub.f32 %v96, %v98
    %v101 = vsub.f32 %v97, %v99
    %102 = vst [vmem:[#allocation5] sm:$0x3f] %v100
    %103 = vst [vmem:[#allocation5 + $0x8] sm:$0x3f] %v101
    // Predicated region
    $region10: #{tpu_custom_call.1} parent=1 // pred_check
      _
    $region11: #{tpu_custom_call.1} parent=1 // pred_check_branch
      %105 = sbr.rel (0) target = $region13
    $region12: #{tpu_custom_call.1} parent=1 // pred_region
      %s107 = ssub.s32 256, 256
      %108 = vsyncadd [#allocation4], %s107
      %s110 = sshll.u32 [#allocation5], 4
      %s111 = int_to_ptr.vmem [resolvable:$true] %s110
      %113 = dma.vmem_to_hbm [thread:$0]  %s111, 256, %s1, [#allocation4]
    $region13: #{tpu_custom_call.1} parent=1 // pred_fallthru
      _
    // Predicated region
    $region14: #{tpu_custom_call.1} parent=1 // pred_check
      _
    $region15: #{tpu_custom_call.1} parent=1 // pred_check_branch
      %115 = sbr.rel (0) target = $region17
    $region16: #{tpu_custom_call.1} parent=1 // pred_region
      %116 = dma.done [#allocation4], 256
    $region17: #{tpu_custom_call.1} parent=1 // pred_fallthru
      _
    %117 = vsyncpa [#allocation3], 1
    %118 = vsyncpa [#allocation4], 1

</llo_original>
